<compile_context>
chip_gen: v5e
topology: v5e:2x2
jax: 0.10.0
libtpu: 0.0.40
codegen_flags: <defaults>
</compile_context>

<pallas_src>
import jax
import jax.numpy as jnp
from jax.experimental import pallas as pl
from jax.experimental.pallas import tpu as pltpu

# Row tile for the batch dimension when N is large. 1024 rows x 1 f32 is tiny
# (2 bufs x in + 2 bufs x out ~= 16 KiB live), safely under VMEM limits on
# v5e / v6e / v7x, while amortizing the ~0.35 us per-grid-step overhead.
MAX_TILE_N = 1024


def linear_kernel(w_ref, b_ref, x_ref, o_ref):
    # w_ref, b_ref: (1, 1) f32 scalars in SMEM.
    # x_ref, o_ref: (tile_n, 1) f32 tiles in VMEM.
    # VPU broadcast multiply-add; scalar operands come from sregs.
    o_ref[...] = x_ref[...] * w_ref[0, 0] + b_ref[0, 0]


def linear_forward(x, w, b):
    """y = x @ w.T + b with x: [N, 1], w: [1, 1], b: [1] (nn.Linear(1, 1))."""
    n, in_f = x.shape
    out_f, _ = w.shape
    assert in_f == 1 and out_f == 1, "LinearModel is nn.Linear(1, 1)"

    x = x.astype(jnp.float32)
    w_s = w.reshape(1, 1).astype(jnp.float32)   # SMEM scalar
    b_s = b.reshape(1, 1).astype(jnp.float32)   # SMEM scalar

    # Small N: single block equal to the full array (no padding needed --
    # the (8,128) divisibility rule only applies when the block is smaller
    # than the array). Large N: 1024-row tiles (multiple of 8); a partial
    # last tile is handled by Pallas' masked writeback.
    tile_n = n if n <= MAX_TILE_N else MAX_TILE_N
    grid = (pl.cdiv(n, tile_n),)

    return pl.pallas_call(
        linear_kernel,
        out_shape=jax.ShapeDtypeStruct((n, out_f), jnp.float32),
        grid=grid,
        in_specs=[
            pl.BlockSpec(memory_space=pltpu.MemorySpace.SMEM),   # w (1,1)
            pl.BlockSpec(memory_space=pltpu.MemorySpace.SMEM),   # b (1,1)
            pl.BlockSpec((tile_n, in_f), lambda i: (i, 0)),      # x row tile
        ],
        out_specs=pl.BlockSpec((tile_n, out_f), lambda i: (i, 0)),
        compiler_params=pltpu.CompilerParams(
            dimension_semantics=("parallel",)),  # megacore split on v7x; no-op on v5e/v6e
    )(w_s, b_s, x)


if __name__ == "__main__":
    key = jax.random.PRNGKey(0)
    kw, kb = jax.random.split(key, 2)

    # nn.Linear(1, 1): weight [1, 1], bias [1], init ~ U(-1, 1) (1/sqrt(1)=1).
    w = jax.random.uniform(kw, (1, 1), jnp.float32, minval=-1.0, maxval=1.0)
    b = jax.random.uniform(kb, (1,), jnp.float32, minval=-1.0, maxval=1.0)

    # Analogous to hour_var = [[4.0]]; use a small batch of 4.
    x = jnp.array([[4.0], [1.0], [2.0], [3.0]], dtype=jnp.float32)

    y = linear_forward(x, w, b)
    jax.block_until_ready(y)

    # Reference check in plain JAX.
    y_ref = x @ w.T + b
    assert y.shape == (4, 1)
    assert jnp.allclose(y, y_ref, atol=1e-6), (y, y_ref)

    print("KERNEL_OK")
</pallas_src>

<mosaic_0001>
module attributes {stable_mosaic.version = 11 : i64} {
  func.func @linear_kernel(%arg0: i32, %arg1: memref<1x1xf32, #tpu.memory_space<smem>>, %arg2: memref<1x1xf32, #tpu.memory_space<smem>>, %arg3: memref<4x1xf32, #tpu.memory_space<vmem>>, %arg4: memref<4x1xf32, #tpu.memory_space<vmem>>) attributes {dimension_semantics = [#tpu.dimension_semantics<parallel>], iteration_bounds = array<i64: 1>, scalar_prefetch = 0 : i64, scratch_operands = 0 : i64, tpu.core_type = #tpu.core_type<tc>, window_params = [{transform_indices = @transform_0, window_bounds = array<i64: 1, 1>}, {transform_indices = @transform_1, window_bounds = array<i64: 1, 1>}, {transform_indices = @transform_2, window_bounds = array<i64: 4, 1>}, {transform_indices = @transform_3, window_bounds = array<i64: 4, 1>}]} {
    %c0 = arith.constant 0 : index
    %c0_0 = arith.constant 0 : index
    %0 = vector.load %arg3[%c0, %c0_0] : memref<4x1xf32, #tpu.memory_space<vmem>>, vector<4x1xf32>
    %c0_1 = arith.constant 0 : index
    %c0_2 = arith.constant 0 : index
    %1 = memref.load %arg1[%c0_1, %c0_2] : memref<1x1xf32, #tpu.memory_space<smem>>
    %2 = vector.broadcast %1 : f32 to vector<4x1xf32>
    %3 = arith.mulf %0, %2 : vector<4x1xf32>
    %c0_3 = arith.constant 0 : index
    %c0_4 = arith.constant 0 : index
    %4 = memref.load %arg2[%c0_3, %c0_4] : memref<1x1xf32, #tpu.memory_space<smem>>
    %5 = vector.broadcast %4 : f32 to vector<4x1xf32>
    %6 = arith.addf %3, %5 : vector<4x1xf32>
    %c0_5 = arith.constant 0 : index
    %c0_6 = arith.constant 0 : index
    %7 = vector.load %arg4[%c0_5, %c0_6] : memref<4x1xf32, #tpu.memory_space<vmem>>, vector<4x1xf32>
    tpu.vector_store %arg4[%c0_5, %c0_6], %6 {strides = array<i32>} : memref<4x1xf32, #tpu.memory_space<vmem>>, vector<4x1xf32>,
    return
  }
  func.func @transform_0(%arg0: i32) -> (i32, i32) {
    %c0_i32 = arith.constant 0 : i32
    %c0_i32_0 = arith.constant 0 : i32
    %c0_i32_1 = arith.constant 0 : i32
    return %c0_i32, %c0_i32_0 : i32, i32
  }
  func.func @transform_1(%arg0: i32) -> (i32, i32) {
    %c0_i32 = arith.constant 0 : i32
    %c0_i32_0 = arith.constant 0 : i32
    %c0_i32_1 = arith.constant 0 : i32
    return %c0_i32, %c0_i32_0 : i32, i32
  }
  func.func @transform_2(%arg0: i32) -> (i32, i32) {
    %c0_i32 = arith.constant 0 : i32
    %c0_i32_0 = arith.constant 0 : i32
    return %arg0, %c0_i32 : i32, i32
  }
  func.func @transform_3(%arg0: i32) -> (i32, i32) {
    %c0_i32 = arith.constant 0 : i32
    %c0_i32_0 = arith.constant 0 : i32
    return %arg0, %c0_i32 : i32, i32
  }
}

</mosaic_0001>

<llo_original>
// kernel: tpu_custom_call.1
$region0: #{tpu_custom_call.1}
  #allocation0 [shape = 'u32[]', space=smem, size = 0x4, offset = 0x4, fixed_abs, tag = 'smem constant byte address 0x4 - core index']
  #allocation1 [shape = 'u32[72,128]{1,0:T(1,128)}', space=vmem, size = 0x9000, scoped, tag = 'internal scratch']
  #allocation2 [shape = 'f32[1,1]{1,0:T(1,128)S(6)}', space=smem, size = 0x200, scoped, tag = 'scoped memory for tpu_custom_call.1']
  #allocation3 [shape = 'f32[1,1]{1,0:T(1,128)S(6)}', space=smem, size = 0x200, scoped, tag = 'scoped memory for tpu_custom_call.1']
  %s0 = inlined_call_operand.<no memory space> [shape: f32[1,1], index: 0, kind: input, shape index: {}]
  %s1 = inlined_call_operand.<no memory space> [shape: f32[1,1], index: 1, kind: input, shape index: {}]
  %s2 = inlined_call_operand.vmem [shape: f32[4,1], index: 2, kind: input, shape index: {}]
  %s3 = inlined_call_operand.vmem [shape: f32[4,1], index: 3, kind: output, shape index: {}]
  %s4 = sld [smem:[#allocation0]]
  $region22: #{tpu_custom_call.1} parent=0
    _
  %s6 = ssub.s32 1, %s4
  %s7 = scalar_select 0, %s6, %s4
  %8 = sst [smem:[#allocation2]] %s0
  %9 = sst [smem:[#allocation3]] %s1
  // Predicated region
  $region2: #{tpu_custom_call.1} parent=0 // pred_check
    _
  $region3: #{tpu_custom_call.1} parent=0 // pred_check_branch
    %11 = sbr.rel (0) target = $region5
  $region4: #{tpu_custom_call.1} parent=0 // pred_region
    _
  $region5: #{tpu_custom_call.1} parent=0 // pred_fallthru
    _
  // Predicated region
  $region6: #{tpu_custom_call.1} parent=0 // pred_check
    _
  $region7: #{tpu_custom_call.1} parent=0 // pred_check_branch
    %13 = sbr.rel (0) target = $region9
  $region8: #{tpu_custom_call.1} parent=0 // pred_region
    _
  $region9: #{tpu_custom_call.1} parent=0 // pred_fallthru
    _
  // Predicated region
  $region10: #{tpu_custom_call.1} parent=0 // pred_check
    _
  $region11: #{tpu_custom_call.1} parent=0 // pred_check_branch
    %15 = sbr.rel (0) target = $region13
  $region12: #{tpu_custom_call.1} parent=0 // pred_region
    _
  $region13: #{tpu_custom_call.1} parent=0 // pred_fallthru
    _
  %v16 = vld [vmem:[%s2] sm:$0xf]
  %s17 = sld [smem:[#allocation2]]
  %v18 = vstv %s17
  %v19 = vmul.f32 %v16, %v18
  %s20 = sld [smem:[#allocation3]]
  %v21 = vstv %s20
  %v22 = vadd.f32 %v19, %v21
  %vm23 = vcmask 3072
  %24 = vst.msk [vmem:[%s3] sm:$0xf] %vm23, %v22
  // Predicated region
  $region14: #{tpu_custom_call.1} parent=0 // pred_check
    _
  $region15: #{tpu_custom_call.1} parent=0 // pred_check_branch
    %26 = sbr.rel (0) target = $region17
  $region16: #{tpu_custom_call.1} parent=0 // pred_region
    _
  $region17: #{tpu_custom_call.1} parent=0 // pred_fallthru
    _
  // Predicated region
  $region18: #{tpu_custom_call.1} parent=0 // pred_check
    _
  $region19: #{tpu_custom_call.1} parent=0 // pred_check_branch
    %28 = sbr.rel (0) target = $region21
  $region20: #{tpu_custom_call.1} parent=0 // pred_region
    _
  $region21: #{tpu_custom_call.1} parent=0 // pred_fallthru
    _

</llo_original>
